<compile_context>
chip_gen: v6e
topology: v6e:2x2x1
jax: 0.10.0
libtpu: 0.0.40
codegen_flags: <defaults>
</compile_context>

<pallas_src>
import functools
import math

import jax
import jax.numpy as jnp
from jax.experimental import pallas as pl
from jax.experimental.pallas import tpu as pltpu


_SINGLE_BLOCK_MAX_N = 512          # below this: one full-array block per layer
_TARGET_ADJ_BLOCK_BYTES = 4 << 20  # per adj tile (x2 for double buffering)


def _round_up(x, m):
    return ((x + m - 1) // m) * m


def _choose_tiles(n, adj_itemsize):
    """Pick (tm, tk) tiles for the [N, N] adjacency.

    tk is the lane-dense (last / contraction) dim: a large multiple of 128 so
    each grid step DMAs several MiB and per-step overhead is amortized.  tm is
    the row (sublane) dim.  The double-buffered adj block stays ~8 MiB, well
    inside v7x's 64 MiB VMEM (v5e/v6e have 128 MiB).
    """
    if n <= _SINGLE_BLOCK_MAX_N:
        return n, n                                   # single full-array block
    tk = min(2048, _round_up(n, 128))
    tm = max(256, (_TARGET_ADJ_BLOCK_BYTES // (tk * adj_itemsize)) // 16 * 16)
    # Keep >= 2 row tiles so the "parallel" row axis can shard across the two
    # TensorCores on v7x.
    tm = min(tm, _round_up(-(-n // 2), 16))
    tm = min(tm, _round_up(n, 16))
    return int(tm), int(tk)


def _adj_spmm_kernel(adj_ref, sup_ref, out_ref, acc_ref, *,
                     n_cols, block_k, apply_relu):
    """One (row-tile, contraction-tile) step of out = act(adj @ support)."""
    k = pl.program_id(1)

    @pl.when(k == 0)
    def _():
        acc_ref[...] = jnp.zeros_like(acc_ref)

    adj_tile = adj_ref[...]
    if n_cols % block_k != 0:
        # Ragged last contraction block: zero the out-of-range columns (the
        # padded region of a Pallas input block is undefined).  The VPU select
        # is hidden under the adj DMA (kernel is HBM-bound).
        valid = n_cols - k * block_k
        col = jax.lax.broadcasted_iota(jnp.int32, adj_tile.shape, 1)
        adj_tile = jnp.where(col < valid, adj_tile, 0)

    start = pl.multiple_of(k * block_k, block_k)
    sup_tile = sup_ref[pl.ds(start, block_k), :]
    acc_ref[...] += jnp.dot(adj_tile, sup_tile,
                            preferred_element_type=jnp.float32)

    @pl.when(k == pl.num_programs(1) - 1)
    def _():
        result = acc_ref[...]
        if apply_relu:
            result = jnp.maximum(result, 0.0)
        out_ref[...] = result.astype(out_ref.dtype)


def _adj_spmm(adj, support, *, apply_relu, block_rows=None, block_cols=None):
    """out = act( adj @ support ), tiled over (rows of adj, contraction)."""
    n = adj.shape[0]
    f_out = support.shape[1]
    itemsize = adj.dtype.itemsize

    tm, tk = _choose_tiles(n, itemsize)
    if block_rows is not None:
        tm = int(block_rows)
    if block_cols is not None:
        tk = int(block_cols)
    assert tm == n or tm % 8 == 0, "row tile must be a multiple of 8 (or == n)"
    assert tk == n or tk % 128 == 0, "contraction tile must be a multiple of 128 (or == n)"

    grid = (pl.cdiv(n, tm), pl.cdiv(n, tk))

    # support stays fully resident in VMEM (constant index_map).  Pad its rows
    # to a multiple of tk with zeros (cheap: n * f_out elements only).
    sup_rows = grid[1] * tk
    if support.shape[0] != sup_rows:
        support = jnp.pad(support, ((0, sup_rows - support.shape[0]), (0, 0)))

    # VMEM budget: double-buffered adj tiles + resident support + accumulator
    # + double-buffered output block (lane dim pads to 128 inside VMEM).
    f_out_pad = _round_up(f_out, 128)
    vmem_needed = (2 * tm * tk * itemsize
                   + sup_rows * f_out_pad * support.dtype.itemsize
                   + 3 * tm * f_out_pad * 4)
    vmem_limit = int(min(max(2 * vmem_needed, 32 << 20), 64 << 20))

    kernel = functools.partial(_adj_spmm_kernel, n_cols=n, block_k=tk,
                               apply_relu=apply_relu)
    return pl.pallas_call(
        kernel,
        out_shape=jax.ShapeDtypeStruct((n, f_out), jnp.float32),
        grid_spec=pltpu.PrefetchScalarGridSpec(
            num_scalar_prefetch=0,
            grid=grid,
            in_specs=[
                pl.BlockSpec((tm, tk), lambda i, k: (i, k)),           # adj tile
                pl.BlockSpec((sup_rows, f_out), lambda i, k: (0, 0)),  # resident support
            ],
            out_specs=pl.BlockSpec((tm, f_out), lambda i, k: (i, 0)),
            scratch_shapes=[pltpu.VMEM((tm, f_out), jnp.float32)],
        ),
        compiler_params=pltpu.CompilerParams(
            dimension_semantics=("parallel", "arbitrary"),
            vmem_limit_bytes=vmem_limit),
        cost_estimate=pl.CostEstimate(
            flops=2 * n * n * f_out,
            transcendentals=0,
            bytes_accessed=(n * n * itemsize
                            + sup_rows * f_out * support.dtype.itemsize
                            + n * f_out * 4)),
    )(adj, support)


def graph_vae_forward(adj, x, w1, w_mean, w_log_std, *, compute_dtype=None,
                      block_rows=None, block_cols=None):
    """GraphVae forward: returns (z_mean, z_log_std), always float32.

    adj is read exactly twice (once per layer).  For the bandwidth-bound fast
    path pass adj already stored in bfloat16; `compute_dtype` forces a cast of
    adj, but that cast is itself a full HBM pass (roughly break-even), so
    prefer native bf16 storage upstream.
    """
    out_dim = w_mean.shape[1]

    if compute_dtype is not None and adj.dtype != jnp.dtype(compute_dtype):
        adj = adj.astype(compute_dtype)
    sup_dtype = adj.dtype

    # Fuse the mean / log_std heads into one lane-denser adj matmul.
    w_cat = jnp.concatenate([w_mean, w_log_std], axis=1)           # [H, 2*out]

    # Hoisted "support" matmuls (tiny: [N, F] @ [F, H] and [N, H] @ [H, 2*out]),
    # computed in f32 and cast once for the MXU-native adj matmul.
    support1 = jnp.dot(x.astype(jnp.float32), w1.astype(jnp.float32))
    hidden = _adj_spmm(adj, support1.astype(sup_dtype), apply_relu=True,
                       block_rows=block_rows, block_cols=block_cols)  # f32
    support2 = jnp.dot(hidden, w_cat.astype(jnp.float32))
    z = _adj_spmm(adj, support2.astype(sup_dtype), apply_relu=False,
                  block_rows=block_rows, block_cols=block_cols)       # f32

    return z[:, :out_dim], z[:, out_dim:]


def xavier_uniform(key, shape, dtype=jnp.float32):
    """Deterministic xavier_uniform_ matching torch.nn.init semantics."""
    fan_in, fan_out = shape
    limit = math.sqrt(6.0 / (fan_in + fan_out))
    return jax.random.uniform(key, shape, dtype=dtype, minval=-limit, maxval=limit)


def reference_forward(adj, x, w1, w_mean, w_log_std):
    hidden = jnp.maximum(adj @ (x @ w1), 0.0)
    return adj @ (hidden @ w_mean), adj @ (hidden @ w_log_std)


if __name__ == "__main__":
    features_dim, hidden_dim, out_dim = 8, 32, 4

    key = jax.random.PRNGKey(0)
    k_graph, k_w1, k_wm, k_ws = jax.random.split(key, 4)

    # Parameters (bias=False in GraphVae default): xavier_uniform init.
    w1 = xavier_uniform(k_w1, (features_dim, hidden_dim))
    w_mean = xavier_uniform(k_wm, (hidden_dim, out_dim))
    w_log_std = xavier_uniform(k_ws, (hidden_dim, out_dim))

    def make_graph(seed_key, n):
        ka, kx = jax.random.split(seed_key)
        a = jax.random.uniform(ka, (n, n), dtype=jnp.float32)
        adjacency = (a + a.T) * 0.5 / n              # dense, roughly normalized
        feats = jax.random.normal(kx, (n, features_dim), dtype=jnp.float32)
        return adjacency, feats

    # --- 1) tiny graph: single full-array block ---
    adj, x = make_graph(k_graph, 16)
    z_mean, z_log_std = graph_vae_forward(adj, x, w1, w_mean, w_log_std)
    jax.block_until_ready((z_mean, z_log_std))
    ref_mean, ref_log_std = reference_forward(adj, x, w1, w_mean, w_log_std)
    assert z_mean.shape == (16, out_dim) and z_log_std.shape == (16, out_dim)
    assert z_mean.dtype == jnp.float32 and z_log_std.dtype == jnp.float32
    assert jnp.allclose(z_mean, ref_mean, atol=1e-4, rtol=1e-4)
    assert jnp.allclose(z_log_std, ref_log_std, atol=1e-4, rtol=1e-4)

    # --- 2) ragged N = 200: auto single-block path AND forced tiled/masked path ---
    adj2, x2 = make_graph(jax.random.PRNGKey(1), 200)
    rm2, rs2 = reference_forward(adj2, x2, w1, w_mean, w_log_std)

    zm2a, zs2a = graph_vae_forward(adj2, x2, w1, w_mean, w_log_std)
    jax.block_until_ready((zm2a, zs2a))
    assert jnp.allclose(zm2a, rm2, atol=1e-4, rtol=1e-4)
    assert jnp.allclose(zs2a, rs2, atol=1e-4, rtol=1e-4)

    # grid (2, 2) with ragged last row/contraction blocks -> in-kernel masking.
    zm2b, zs2b = graph_vae_forward(adj2, x2, w1, w_mean, w_log_std,
                                   block_rows=128, block_cols=128)
    jax.block_until_ready((zm2b, zs2b))
    assert zm2b.shape == (200, out_dim) and zs2b.shape == (200, out_dim)
    assert jnp.allclose(zm2b, rm2, atol=1e-4, rtol=1e-4)
    assert jnp.allclose(zs2b, rs2, atol=1e-4, rtol=1e-4)

    # --- 3) bf16-native adjacency (fast path), multiple row tiles (grid (2, 2)) ---
    adj3, x3 = make_graph(jax.random.PRNGKey(2), 512)
    rm3, rs3 = reference_forward(adj3, x3, w1, w_mean, w_log_std)
    zm3, zs3 = graph_vae_forward(adj3.astype(jnp.bfloat16), x3, w1, w_mean,
                                 w_log_std, block_rows=256, block_cols=256)
    jax.block_until_ready((zm3, zs3))
    assert zm3.dtype == jnp.float32 and zs3.dtype == jnp.float32
    assert jnp.allclose(zm3, rm3, atol=2e-2, rtol=2e-2)
    assert jnp.allclose(zs3, rs3, atol=2e-2, rtol=2e-2)

    print("KERNEL_OK")
</pallas_src>

<mosaic_0001>
module attributes {stable_mosaic.version = 11 : i64} {
  func.func @_adj_spmm_kernel(%arg0: i32, %arg1: i32, %arg2: memref<16x16xf32, #tpu.memory_space<vmem>>, %arg3: memref<16x32xf32, #tpu.memory_space<vmem>>, %arg4: memref<16x32xf32, #tpu.memory_space<vmem>>, %arg5: memref<16x32xf32, #tpu.memory_space<vmem>>) attributes {dimension_semantics = [#tpu.dimension_semantics<parallel>, #tpu.dimension_semantics<arbitrary>], iteration_bounds = array<i64: 1, 1>, scalar_prefetch = 0 : i64, scratch_operands = 1 : i64, tpu.core_type = #tpu.core_type<tc>, window_params = [{transform_indices = @transform_0, window_bounds = array<i64: 16, 16>}, {pipeline_mode = #tpu.pipeline_mode<synchronous>, transform_indices = @transform_1, window_bounds = array<i64: 16, 32>}, {transform_indices = @transform_2, window_bounds = array<i64: 16, 32>}]} {
    %c0_i32 = arith.constant 0 : i32
    %0 = arith.cmpi eq, %arg1, %c0_i32 : i32
    %1 = arith.extui %0 : i1 to i32
    %c0_i32_0 = arith.constant 0 : i32
    %2 = arith.cmpi ne, %1, %c0_i32_0 : i32
    scf.if %2 {
      %cst_9 = arith.constant 0.000000e+00 : f32
      %15 = vector.broadcast %cst_9 : f32 to vector<16x32xf32>
      %c0_10 = arith.constant 0 : index
      %c0_11 = arith.constant 0 : index
      %16 = vector.load %arg5[%c0_10, %c0_11] : memref<16x32xf32, #tpu.memory_space<vmem>>, vector<16x32xf32>
      tpu.vector_store %arg5[%c0_10, %c0_11], %15 {strides = array<i32>} : memref<16x32xf32, #tpu.memory_space<vmem>>, vector<16x32xf32>,
    } else {
    }
    %c0 = arith.constant 0 : index
    %c0_1 = arith.constant 0 : index
    %3 = vector.load %arg2[%c0, %c0_1] : memref<16x16xf32, #tpu.memory_space<vmem>>, vector<16x16xf32>
    %c16_i32 = arith.constant 16 : i32
    %4 = arith.muli %arg1, %c16_i32 : i32
    %5 = tpu.assume_multiple %4, 16 : i32
    %6 = arith.index_cast %5 : i32 to index
    %c0_2 = arith.constant 0 : index
    %7 = vector.load %arg3[%6, %c0_2] : memref<16x32xf32, #tpu.memory_space<vmem>>, vector<16x32xf32>
    %c0_3 = arith.constant 0 : index
    %c0_4 = arith.constant 0 : index
    %8 = vector.load %arg5[%c0_3, %c0_4] : memref<16x32xf32, #tpu.memory_space<vmem>>, vector<16x32xf32>
    %cst = arith.constant dense<0.000000e+00> : vector<16x32xf32>
    %9 = tpu.matmul %3, %7, %cst {dimension_numbers = #tpu.dot_dimension_numbers<[1], [0], [0], [1], [0, 0, 1, 1], [], []>} : vector<16x16xf32>, vector<16x32xf32>, vector<16x32xf32> -> vector<16x32xf32>
    %10 = arith.addf %8, %9 : vector<16x32xf32>
    %c0_5 = arith.constant 0 : index
    %c0_6 = arith.constant 0 : index
    %11 = vector.load %arg5[%c0_5, %c0_6] : memref<16x32xf32, #tpu.memory_space<vmem>>, vector<16x32xf32>
    tpu.vector_store %arg5[%c0_5, %c0_6], %10 {strides = array<i32>} : memref<16x32xf32, #tpu.memory_space<vmem>>, vector<16x32xf32>,
    %c0_i32_7 = arith.constant 0 : i32
    %12 = arith.cmpi eq, %arg1, %c0_i32_7 : i32
    %13 = arith.extui %12 : i1 to i32
    %c0_i32_8 = arith.constant 0 : i32
    %14 = arith.cmpi ne, %13, %c0_i32_8 : i32
    scf.if %14 {
      %c0_9 = arith.constant 0 : index
      %c0_10 = arith.constant 0 : index
      %15 = vector.load %arg5[%c0_9, %c0_10] : memref<16x32xf32, #tpu.memory_space<vmem>>, vector<16x32xf32>
      %cst_11 = arith.constant 0.000000e+00 : f32
      %16 = vector.broadcast %cst_11 : f32 to vector<16x32xf32>
      %17 = arith.maximumf %15, %16 : vector<16x32xf32>
      %c0_12 = arith.constant 0 : index
      %c0_13 = arith.constant 0 : index
      %18 = vector.load %arg4[%c0_12, %c0_13] : memref<16x32xf32, #tpu.memory_space<vmem>>, vector<16x32xf32>
      tpu.vector_store %arg4[%c0_12, %c0_13], %17 {strides = array<i32>} : memref<16x32xf32, #tpu.memory_space<vmem>>, vector<16x32xf32>,
    } else {
    }
    return
  }
  func.func @transform_0(%arg0: i32, %arg1: i32) -> (i32, i32) {
    %c0_i32 = arith.constant 0 : i32
    return %arg0, %arg1 : i32, i32
  }
  func.func @transform_1(%arg0: i32, %arg1: i32) -> (i32, i32) {
    %c0_i32 = arith.constant 0 : i32
    %c0_i32_0 = arith.constant 0 : i32
    %c0_i32_1 = arith.constant 0 : i32
    return %c0_i32, %c0_i32_0 : i32, i32
  }
  func.func @transform_2(%arg0: i32, %arg1: i32) -> (i32, i32) {
    %c0_i32 = arith.constant 0 : i32
    %c0_i32_0 = arith.constant 0 : i32
    return %arg0, %c0_i32 : i32, i32
  }
}

</mosaic_0001>

<llo_original>
// kernel: tpu_custom_call.1
$region0: #{tpu_custom_call.1}
  #allocation0 [shape = 'u32[]', space=smem, size = 0x4, offset = 0x4, fixed_abs, tag = 'smem constant byte address 0x4 - core index']
  #allocation1 [shape = 'u32[144,128]{1,0:T(1,128)}', space=vmem, size = 0x12000, scoped, tag = 'internal scratch']
  #allocation2 [shape = 'f32[16,32]{1,0:T(8,128)}', space=vmem, size = 0x2000, scoped, tag = 'scratch operand']
  %s0 = inlined_call_operand.hbm [shape: f32[16,16], index: 0, kind: input, shape index: {}]
  %s1 = inlined_call_operand.hbm [shape: f32[16,32], index: 1, kind: input, shape index: {}]
  %s2 = inlined_call_operand.hbm [shape: f32[16,32], index: 2, kind: output, shape index: {}]
  %s3 = sld [smem:[#allocation0]]
  $region34: #{tpu_custom_call.1} parent=0
    _
  %s5 = ssub.s32 1, %s3
  %s6 = scalar_select 0, %s5, %s3
  $region1: #{tpu_custom_call.1} parent=0
    #allocation3 [shape = 'u8[8192]{0}', space=vmem, size = 0x2000, scoped, tag = 'input window, operand 0, single buffered']
    #allocation4 [shape = 's32[1]{0}', space=sflag, size = 0x4, scoped, tag = 'scoped memory for tpu_custom_call.1']
    #allocation5 [shape = 's32[1]{0}', space=sflag, size = 0x4, scoped, tag = 'scoped memory for tpu_custom_call.1']
    #allocation6 [shape = 'u8[8192]{0}', space=vmem, size = 0x2000, scoped, tag = 'input window, operand 1, single buffered']
    #allocation7 [shape = 's32[1]{0}', space=sflag, size = 0x4, scoped, tag = 'scoped memory for tpu_custom_call.1']
    #allocation8 [shape = 'u8[8192]{0}', space=vmem, size = 0x2000, scoped, tag = 'output window, operand 0, single buffered']
    %7 = vsyncpa [#allocation4], 0
    %8 = vsyncpa [#allocation7], 0
    %9 = vsyncpa [#allocation5], 0
    // Predicated region
    $region2: #{tpu_custom_call.1} parent=1 // pred_check
      _
    $region3: #{tpu_custom_call.1} parent=1 // pred_check_branch
      %11 = sbr.rel (0) target = $region5
    $region4: #{tpu_custom_call.1} parent=1 // pred_region
      %s13 = ssub.s32 256, 256
      %14 = vsyncadd [#allocation4], %s13
      %s15 = sshll.u32 [#allocation3], 4
      %s16 = int_to_ptr.vmem [resolvable:$true] %s15
      %21 = dma.hbm_to_vmem [thread:$0]  %s0, 256, %s16, [#allocation4], 128, 128, 8
    $region5: #{tpu_custom_call.1} parent=1 // pred_fallthru
      _
    // Predicated region
    $region6: #{tpu_custom_call.1} parent=1 // pred_check
      _
    $region7: #{tpu_custom_call.1} parent=1 // pred_check_branch
      %23 = sbr.rel (0) target = $region9
    $region8: #{tpu_custom_call.1} parent=1 // pred_region
      %s25 = ssub.s32 256, 256
      %26 = vsyncadd [#allocation7], %s25
      %s27 = sshll.u32 [#allocation6], 4
      %s28 = int_to_ptr.vmem [resolvable:$true] %s27
      %33 = dma.hbm_to_vmem [thread:$0]  %s1, 256, %s28, [#allocation7], 128, 128, 8
    $region9: #{tpu_custom_call.1} parent=1 // pred_fallthru
      _
    // Predicated region
    $region10: #{tpu_custom_call.1} parent=1 // pred_check
      _
    $region11: #{tpu_custom_call.1} parent=1 // pred_check_branch
      %35 = sbr.rel (0) target = $region13
    $region12: #{tpu_custom_call.1} parent=1 // pred_region
      %36 = dma.done [#allocation4], 256
    $region13: #{tpu_custom_call.1} parent=1 // pred_fallthru
      _
    // Predicated region
    $region14: #{tpu_custom_call.1} parent=1 // pred_check
      _
    $region15: #{tpu_custom_call.1} parent=1 // pred_check_branch
      %38 = sbr.rel (0) target = $region17
    $region16: #{tpu_custom_call.1} parent=1 // pred_region
      %39 = dma.done [#allocation7], 256
    $region17: #{tpu_custom_call.1} parent=1 // pred_fallthru
      _
    %p40 = scmp.eq.s32.totalorder 0, 0
    // Predicated region
    $region18: #{tpu_custom_call.1} parent=1 // pred_check
      %p41 = pneg %p40
    $region19: #{tpu_custom_call.1} parent=1 // pred_check_branch
      %43 = sbr.rel (%p41) target = $region21
    $region20: #{tpu_custom_call.1} parent=1 // pred_region
      %vm44 = vcmask 261120
      %45 = vst.msk [vmem:[#allocation2] sm:$0xff] %vm44, 0.0
      %46 = vst.msk [vmem:[#allocation2 + $0x8] sm:$0xff] %vm44, 0.0
    $region21: #{tpu_custom_call.1} parent=1 // pred_fallthru
      _
    %v47 = vld [vmem:[#allocation3] sm:$0xff]
    %v48 = vld [vmem:[#allocation3 + $0x8] sm:$0xff]
    %s49 = smul.u32 0, 16
    %s50 = scalar_lea.vmem [#allocation6], %s49
    %v51 = vld [vmem:[%s50] sm:$0xff]
    %v52 = vld [vmem:[%s50 + $0x8] sm:$0xff]
    %v53 = vld [vmem:[#allocation2] sm:$0xff]
    %v54 = vld [vmem:[#allocation2 + $0x8] sm:$0xff]
    %vm55 = vcmask 130048
    %v57 = vsel %vm55, %v47, 0
    %v60 = vsel %vm55, %v48, 0
    %62 = vmatprep.subr.mxu0 0.0
    %63 = vmatpush1.msra.mxu0 0.0
    %64 = vmatprep.subr.mxu0 0.0
    %65 = vmatpush1.msra.mxu0 0.0
    %66 = vmatprep.subr.mxu0 0.0
    %67 = vmatpush1.msra.mxu0 0.0
    %68 = vmatprep.subr.mxu0 0.0
    %69 = vmatpush1.msra.mxu0 0.0
    %70 = vmatprep.subr.mxu0 0.0
    %71 = vmatpush1.msra.mxu0 0.0
    %72 = vmatprep.subr.mxu0 0.0
    %73 = vmatpush1.msra.mxu0 0.0
    %74 = vmatprep.subr.mxu0 0.0
    %75 = vmatpush1.msra.mxu0 0.0
    %76 = vmatprep.subr.mxu0 0.0
    %77 = vmatpush1.msra.mxu0 0.0
    %78 = vmatprep.subr.mxu0 0.0
    %79 = vmatpush1.msra.mxu0 0.0
    %80 = vmatprep.subr.mxu0 0.0
    %81 = vmatpush1.msra.mxu0 0.0
    %82 = vmatprep.subr.mxu0 0.0
    %83 = vmatpush1.msra.mxu0 0.0
    %84 = vmatprep.subr.mxu0 0.0
    %85 = vmatpush1.msra.mxu0 0.0
    %86 = vmatprep.subr.mxu0 0.0
    %87 = vmatpush1.msra.mxu0 0.0
    %88 = vmatprep.subr.mxu0 0.0
    %89 = vmatpush1.msra.mxu0 0.0
    %90 = vmatprep.subr.mxu0 0.0
    %91 = vmatpush1.msra.mxu0 %v52
    %92 = vmatprep.subr.mxu0 0.0
    %93 = vmatpush1.msra.mxu0 %v51
    %94 = vmatprep.subr.mxu0 0.0
    %95 = vmatpush2.msra.mxu0 0.0
    %96 = vmatprep.subr.mxu0 0.0
    %97 = vmatpush2.msra.mxu0 0.0
    %98 = vmatprep.subr.mxu0 0.0
    %99 = vmatpush2.msra.mxu0 0.0
    %100 = vmatprep.subr.mxu0 0.0
    %101 = vmatpush2.msra.mxu0 0.0
    %102 = vmatprep.subr.mxu0 0.0
    %103 = vmatpush2.msra.mxu0 0.0
    %104 = vmatprep.subr.mxu0 0.0
    %105 = vmatpush2.msra.mxu0 0.0
    %106 = vmatprep.subr.mxu0 0.0
    %107 = vmatpush2.msra.mxu0 0.0
    %108 = vmatprep.subr.mxu0 0.0
    %109 = vmatpush2.msra.mxu0 0.0
    %110 = vmatprep.subr.mxu0 0.0
    %111 = vmatpush2.msra.mxu0 0.0
    %112 = vmatprep.subr.mxu0 0.0
    %113 = vmatpush2.msra.mxu0 0.0
    %114 = vmatprep.subr.mxu0 0.0
    %115 = vmatpush2.msra.mxu0 0.0
    %116 = vmatprep.subr.mxu0 0.0
    %117 = vmatpush2.msra.mxu0 0.0
    %118 = vmatprep.subr.mxu0 0.0
    %119 = vmatpush2.msra.mxu0 0.0
    %120 = vmatprep.subr.mxu0 0.0
    %121 = vmatpush2.msra.mxu0 0.0
    %122 = vmatprep.subr.mxu0 0.0
    %123 = vmatpush2.msra.mxu0 0.0
    %124 = vmatprep.subr.mxu0 0.0
    %125 = vmatpush2.msra.mxu0 0.0
    %126 = vmatprep.mubr.f32.mxu0 0.0
    %127 = vmatmul.mubr.f32.gmra.mxu0 %v57
    %v128 = vpop.f32.mrf.mxu0
    %v129 = vadd.f32 0.0, %v128
    %v130 = vpop.f32.mrf.mxu0
    %131 = vmatprep.mubr.f32.mxu0 0.0
    %132 = vmatmul.mubr.f32.gmra.mxu0 %v60
    %v133 = vpop.f32.mrf.mxu0
    %v134 = vadd.f32 0.0, %v133
    %v135 = vpop.f32.mrf.mxu0
    %136 = vdwg.mxu0
    %v137 = vadd.f32 %v53, %v129
    %v138 = vadd.f32 %v54, %v134
    %vm139 = vcmask 261120
    %140 = vst.msk [vmem:[#allocation2] sm:$0xff] %vm139, %v137
    %141 = vst.msk [vmem:[#allocation2 + $0x8] sm:$0xff] %vm139, %v138
    // Predicated region
    $region22: #{tpu_custom_call.1} parent=1 // pred_check
      %p142 = pneg %p40
    $region23: #{tpu_custom_call.1} parent=1 // pred_check_branch
      %144 = sbr.rel (%p142) target = $region25
    $region24: #{tpu_custom_call.1} parent=1 // pred_region
      %v145 = vld [vmem:[#allocation2] sm:$0xff]
      %v146 = vld [vmem:[#allocation2 + $0x8] sm:$0xff]
      %v147 = vmax.f32 %v145, 0.0
      %v148 = vmax.f32 %v146, 0.0
      %149 = vst.msk [vmem:[#allocation8] sm:$0xff] %vm139, %v147
      %150 = vst.msk [vmem:[#allocation8 + $0x8] sm:$0xff] %vm139, %v148
    $region25: #{tpu_custom_call.1} parent=1 // pred_fallthru
      _
    // Predicated region
    $region26: #{tpu_custom_call.1} parent=1 // pred_check
      _
    $region27: #{tpu_custom_call.1} parent=1 // pred_check_branch
      %152 = sbr.rel (0) target = $region29
    $region28: #{tpu_custom_call.1} parent=1 // pred_region
      %s154 = ssub.s32 256, 256
      %155 = vsyncadd [#allocation5], %s154
      %s156 = sshll.u32 [#allocation8], 4
      %s157 = int_to_ptr.vmem [resolvable:$true] %s156
      %162 = dma.vmem_to_hbm [thread:$0]  %s157, 256, %s2, [#allocation5], 128, 128, 8
    $region29: #{tpu_custom_call.1} parent=1 // pred_fallthru
      _
    // Predicated region
    $region30: #{tpu_custom_call.1} parent=1 // pred_check
      _
    $region31: #{tpu_custom_call.1} parent=1 // pred_check_branch
      %164 = sbr.rel (0) target = $region33
    $region32: #{tpu_custom_call.1} parent=1 // pred_region
      %165 = dma.done [#allocation5], 256
    $region33: #{tpu_custom_call.1} parent=1 // pred_fallthru
      _
    %166 = vsyncpa [#allocation4], 1
    %167 = vsyncpa [#allocation7], 1
    %168 = vsyncpa [#allocation5], 1

</llo_original>
